<compile_context>
chip_gen: v7x
topology: tpu7x:2x2x1
jax: 0.10.0
libtpu: 0.0.40
codegen_flags: <defaults>
</compile_context>

<pallas_src>
import functools

import jax
import jax.numpy as jnp
from jax.experimental import pallas as pl
from jax.experimental.pallas import tpu as pltpu


def rnn_seq_kernel(x_ref, h0_ref, w_ref, b_ref, out_ref, hid_ref, *,
                   input_size, hidden_size):
    """One grid step == one RNN time step.

    x_ref   : (Bp, I)       current input block (indexed by t)
    h0_ref  : (Bp, H)       initial hidden (resident, read once at t==0)
    w_ref   : (I+H, H+O)    fused [W_i2h | W_i2o] (VMEM-resident across steps)
    b_ref   : (1,   H+O)    fused bias            (VMEM-resident across steps)
    out_ref : (Bp, O)       log-softmax output block for step t
    hid_ref : (Bp, H)       carried hidden state (resident accumulator block)
    """
    t = pl.program_id(0)

    # Initialize the carried hidden state from h0 on the first step only.
    @pl.when(t == 0)
    def _():
        hid_ref[...] = h0_ref[...]

    x = x_ref[...]                       # (Bp, I)
    h = hid_ref[...]                     # (Bp, H)

    # "concat([x, h]) @ W" done as two row-split matmuls (no lane concat).
    # W already fuses i2h and i2o along the output dim, so a single (padded)
    # MXU pass worth of columns produces both heads.
    y = (jnp.dot(x, w_ref[0:input_size, :], preferred_element_type=jnp.float32)
         + jnp.dot(h, w_ref[input_size:, :], preferred_element_type=jnp.float32)
         + b_ref[...])                   # (Bp, H + O)

    h_new = y[:, :hidden_size]           # i2h head
    logits = y[:, hidden_size:]          # i2o head

    # Numerically stable LogSoftmax along the feature axis (dim=1).
    m = jnp.max(logits, axis=-1, keepdims=True)
    shifted = logits - m
    lse = jnp.log(jnp.sum(jnp.exp(shifted), axis=-1, keepdims=True))

    hid_ref[...] = h_new
    out_ref[...] = (shifted - lse).astype(out_ref.dtype)


def _pack_params(params):
    """Fuse i2h / i2o weights & biases along the output dimension."""
    w_ih, b_ih, w_io, b_io = params
    w_cat = jnp.concatenate([w_ih, w_io], axis=1)            # (C, H + O)
    b_cat = jnp.concatenate([b_ih, b_io]).reshape(1, -1)     # (1, H + O)
    return w_cat, b_cat


def my_rnn_sequence(x_seq, hidden, params):
    """Run the RNN over a whole sequence inside ONE pallas_call.

    x_seq : (T, B, input_size), hidden : (B, hidden_size)
    Returns (log_softmax outputs (T, B, output_size), final hidden (B, H)).
    """
    w_ih, _, w_io, _ = params
    T, B, I = x_seq.shape
    H = w_ih.shape[1]
    O = w_io.shape[1]
    C = I + H

    w_cat, b_cat = _pack_params(params)

    # Pad batch to a full sublane multiple (>= 8) so vregs are not half-empty
    # and the compiler does not emit masked sublane loads/stores.
    Bp = max(8, ((B + 7) // 8) * 8)
    if Bp != B:
        x_seq = jnp.pad(x_seq, ((0, 0), (0, Bp - B), (0, 0)))
        hidden = jnp.pad(hidden, ((0, Bp - B), (0, 0)))

    kernel = functools.partial(rnn_seq_kernel, input_size=I, hidden_size=H)

    out, hid = pl.pallas_call(
        kernel,
        out_shape=(
            jax.ShapeDtypeStruct((T, Bp, O), jnp.float32),
            jax.ShapeDtypeStruct((Bp, H), jnp.float32),
        ),
        grid_spec=pltpu.PrefetchScalarGridSpec(
            num_scalar_prefetch=0,
            grid=(T,),
            in_specs=[
                # per-step input slice
                pl.BlockSpec((None, Bp, I), lambda t: (t, 0, 0)),
                # initial hidden: constant index -> DMA'd once, VMEM-resident
                pl.BlockSpec((Bp, H), lambda t: (0, 0)),
                # fused weight: constant index -> VMEM-resident across steps
                pl.BlockSpec((C, H + O), lambda t: (0, 0)),
                # fused bias: constant index -> VMEM-resident across steps
                pl.BlockSpec((1, H + O), lambda t: (0, 0)),
            ],
            out_specs=(
                # per-step log-softmax block
                # TODO(synk): for large T / real vocab O, pad O to a multiple
                # of 128 so per-step stores are unmasked lane-dense vst.
                pl.BlockSpec((None, Bp, O), lambda t: (t, 0, 0)),
                # carried hidden state: constant index -> resident accumulator,
                # written back to HBM once at the end of the grid.
                pl.BlockSpec((Bp, H), lambda t: (0, 0)),
            ),
        ),
        compiler_params=pltpu.CompilerParams(
            dimension_semantics=("arbitrary",)),   # time steps are sequential
    )(x_seq, hidden, w_cat, b_cat)

    return out[:, :B, :], hid[:B, :]


def my_rnn_forward(input_tensor, hidden_tensor, params):
    """Single-step forward matching MY_RNN.forward: returns (output, hidden)."""
    out_seq, hid = my_rnn_sequence(input_tensor[None], hidden_tensor, params)
    return out_seq[0], hid


def init_params(key, input_size, hidden_size, output_size):
    """Deterministic init mirroring nn.Linear default (U[-1/sqrt(fan_in), +])."""
    C = input_size + hidden_size
    k1, k2, k3, k4 = jax.random.split(key, 4)
    bound = 1.0 / jnp.sqrt(jnp.float32(C))
    # stored as (in_features, out_features) == PyTorch weight transposed
    w_ih = jax.random.uniform(k1, (C, hidden_size), jnp.float32, -bound, bound)
    b_ih = jax.random.uniform(k2, (hidden_size,), jnp.float32, -bound, bound)
    w_io = jax.random.uniform(k3, (C, output_size), jnp.float32, -bound, bound)
    b_io = jax.random.uniform(k4, (output_size,), jnp.float32, -bound, bound)
    return (w_ih, b_ih, w_io, b_io)


def reference_forward(input_tensor, hidden_tensor, params):
    """Pure-JAX single-step reference."""
    w_ih, b_ih, w_io, b_io = params
    combined = jnp.concatenate([input_tensor, hidden_tensor], axis=1)
    hidden = combined @ w_ih + b_ih
    logits = combined @ w_io + b_io
    output = jax.nn.log_softmax(logits, axis=1)
    return output, hidden


def reference_sequence(x_seq, hidden, params):
    """Pure-JAX per-step reference loop for the fused-sequence kernel."""
    outs = []
    for t in range(x_seq.shape[0]):
        out, hidden = reference_forward(x_seq[t], hidden, params)
        outs.append(out)
    return jnp.stack(outs, axis=0), hidden


if __name__ == "__main__":
    batch = 4
    input_size = 16
    hidden_size = 32
    output_size = 8
    seq_len = 6

    key = jax.random.PRNGKey(0)
    kx, kh, kp = jax.random.split(key, 3)

    x_seq = jax.random.normal(kx, (seq_len, batch, input_size), jnp.float32)
    h0 = jax.random.normal(kh, (batch, hidden_size), jnp.float32)
    params = init_params(kp, input_size, hidden_size, output_size)

    # --- single-step forward (exact MY_RNN.forward semantics) ---
    out, new_hidden = my_rnn_forward(x_seq[0], h0, params)
    out = jax.block_until_ready(out)
    new_hidden = jax.block_until_ready(new_hidden)

    ref_out, ref_hidden = reference_forward(x_seq[0], h0, params)
    assert out.shape == (batch, output_size)
    assert new_hidden.shape == (batch, hidden_size)
    assert jnp.allclose(out, ref_out, atol=1e-4, rtol=1e-4), "step output mismatch"
    assert jnp.allclose(new_hidden, ref_hidden, atol=1e-4, rtol=1e-4), \
        "step hidden mismatch"

    # --- fused full-sequence forward (one pallas_call for all T steps) ---
    seq_out, seq_hidden = my_rnn_sequence(x_seq, h0, params)
    seq_out = jax.block_until_ready(seq_out)
    seq_hidden = jax.block_until_ready(seq_hidden)

    ref_seq_out, ref_seq_hidden = reference_sequence(x_seq, h0, params)
    assert seq_out.shape == (seq_len, batch, output_size)
    assert seq_hidden.shape == (batch, hidden_size)
    assert jnp.allclose(seq_out, ref_seq_out, atol=1e-4, rtol=1e-4), \
        "sequence output mismatch"
    assert jnp.allclose(seq_hidden, ref_seq_hidden, atol=1e-4, rtol=1e-4), \
        "sequence hidden mismatch"

    print("KERNEL_OK")
</pallas_src>

<mosaic_0001>
module attributes {stable_mosaic.version = 11 : i64} {
  func.func @rnn_seq_kernel(%arg0: i32, %arg1: memref<1x8x16xf32, #tpu.memory_space<vmem>>, %arg2: memref<8x32xf32, #tpu.memory_space<vmem>>, %arg3: memref<48x40xf32, #tpu.memory_space<vmem>>, %arg4: memref<1x40xf32, #tpu.memory_space<vmem>>, %arg5: memref<1x8x8xf32, #tpu.memory_space<vmem>>, %arg6: memref<8x32xf32, #tpu.memory_space<vmem>>) attributes {dimension_semantics = [#tpu.dimension_semantics<arbitrary>], iteration_bounds = array<i64: 1>, scalar_prefetch = 0 : i64, scratch_operands = 0 : i64, tpu.core_type = #tpu.core_type<tc>, window_params = [{transform_indices = @transform_0, window_bounds = array<i64: 1, 8, 16>}, {pipeline_mode = #tpu.pipeline_mode<synchronous>, transform_indices = @transform_1, window_bounds = array<i64: 8, 32>}, {pipeline_mode = #tpu.pipeline_mode<synchronous>, transform_indices = @transform_2, window_bounds = array<i64: 48, 40>}, {pipeline_mode = #tpu.pipeline_mode<synchronous>, transform_indices = @transform_3, window_bounds = array<i64: 1, 40>}, {transform_indices = @transform_4, window_bounds = array<i64: 1, 8, 8>}, {pipeline_mode = #tpu.pipeline_mode<synchronous>, transform_indices = @transform_5, window_bounds = array<i64: 8, 32>}]} {
    %c0_i32 = arith.constant 0 : i32
    %0 = arith.cmpi eq, %arg0, %c0_i32 : i32
    %1 = arith.extui %0 : i1 to i32
    %c0_i32_0 = arith.constant 0 : i32
    %2 = arith.cmpi ne, %1, %c0_i32_0 : i32
    scf.if %2 {
      %c0_18 = arith.constant 0 : index
      %c0_19 = arith.constant 0 : index
      %30 = vector.load %arg2[%c0_18, %c0_19] : memref<8x32xf32, #tpu.memory_space<vmem>>, vector<8x32xf32>
      %c0_20 = arith.constant 0 : index
      %c0_21 = arith.constant 0 : index
      %31 = vector.load %arg6[%c0_20, %c0_21] : memref<8x32xf32, #tpu.memory_space<vmem>>, vector<8x32xf32>
      tpu.vector_store %arg6[%c0_20, %c0_21], %30 {strides = array<i32>} : memref<8x32xf32, #tpu.memory_space<vmem>>, vector<8x32xf32>,
    } else {
    }
    %c0 = arith.constant 0 : index
    %c0_1 = arith.constant 0 : index
    %c0_2 = arith.constant 0 : index
    %3 = vector.load %arg1[%c0, %c0_1, %c0_2] : memref<1x8x16xf32, #tpu.memory_space<vmem>>, vector<1x8x16xf32>
    %4 = vector.shape_cast %3 : vector<1x8x16xf32> to vector<8x16xf32>
    %c0_3 = arith.constant 0 : index
    %c0_4 = arith.constant 0 : index
    %5 = vector.load %arg6[%c0_3, %c0_4] : memref<8x32xf32, #tpu.memory_space<vmem>>, vector<8x32xf32>
    %c0_5 = arith.constant 0 : index
    %c0_6 = arith.constant 0 : index
    %6 = vector.load %arg3[%c0_5, %c0_6] : memref<48x40xf32, #tpu.memory_space<vmem>>, vector<16x40xf32>
    %cst = arith.constant dense<0.000000e+00> : vector<8x40xf32>
    %7 = tpu.matmul %4, %6, %cst {dimension_numbers = #tpu.dot_dimension_numbers<[1], [0], [0], [1], [0, 0, 1, 1], [], []>} : vector<8x16xf32>, vector<16x40xf32>, vector<8x40xf32> -> vector<8x40xf32>
    %c16 = arith.constant 16 : index
    %c0_7 = arith.constant 0 : index
    %8 = vector.load %arg3[%c16, %c0_7] : memref<48x40xf32, #tpu.memory_space<vmem>>, vector<32x40xf32>
    %cst_8 = arith.constant dense<0.000000e+00> : vector<8x40xf32>
    %9 = tpu.matmul %5, %8, %cst_8 {dimension_numbers = #tpu.dot_dimension_numbers<[1], [0], [0], [1], [0, 0, 1, 1], [], []>} : vector<8x32xf32>, vector<32x40xf32>, vector<8x40xf32> -> vector<8x40xf32>
    %10 = arith.addf %7, %9 : vector<8x40xf32>
    %c0_9 = arith.constant 0 : index
    %c0_10 = arith.constant 0 : index
    %11 = vector.load %arg4[%c0_9, %c0_10] : memref<1x40xf32, #tpu.memory_space<vmem>>, vector<1x40xf32>
    %12 = vector.broadcast %11 : vector<1x40xf32> to vector<8x40xf32>
    %13 = arith.addf %10, %12 : vector<8x40xf32>
    %14 = vector.extract_strided_slice %13 {offsets = [0, 0], sizes = [8, 32], strides = [1, 1]} : vector<8x40xf32> to vector<8x32xf32>
    %15 = vector.extract_strided_slice %13 {offsets = [0, 32], sizes = [8, 8], strides = [1, 1]} : vector<8x40xf32> to vector<8x8xf32>
    %cst_11 = arith.constant dense<0xFF800000> : vector<8xf32>
    %16 = vector.multi_reduction <maximumf>, %15, %cst_11 [1] : vector<8x8xf32> to vector<8xf32>
    %17 = vector.shape_cast %16 : vector<8xf32> to vector<8x1xf32>
    %18 = vector.broadcast %17 : vector<8x1xf32> to vector<8x8xf32>
    %19 = arith.subf %15, %18 : vector<8x8xf32>
    %20 = math.exp %19 : vector<8x8xf32>
    %cst_12 = arith.constant dense<0.000000e+00> : vector<8xf32>
    %21 = vector.multi_reduction <add>, %20, %cst_12 [1] : vector<8x8xf32> to vector<8xf32>
    %22 = vector.shape_cast %21 : vector<8xf32> to vector<8x1xf32>
    %23 = math.log %22 : vector<8x1xf32>
    %c0_13 = arith.constant 0 : index
    %c0_14 = arith.constant 0 : index
    %24 = vector.load %arg6[%c0_13, %c0_14] : memref<8x32xf32, #tpu.memory_space<vmem>>, vector<8x32xf32>
    tpu.vector_store %arg6[%c0_13, %c0_14], %14 {strides = array<i32>} : memref<8x32xf32, #tpu.memory_space<vmem>>, vector<8x32xf32>,
    %25 = vector.broadcast %23 : vector<8x1xf32> to vector<8x8xf32>
    %26 = arith.subf %19, %25 : vector<8x8xf32>
    %c0_15 = arith.constant 0 : index
    %c0_16 = arith.constant 0 : index
    %c0_17 = arith.constant 0 : index
    %27 = vector.load %arg5[%c0_15, %c0_16, %c0_17] : memref<1x8x8xf32, #tpu.memory_space<vmem>>, vector<1x8x8xf32>
    %28 = vector.shape_cast %27 : vector<1x8x8xf32> to vector<8x8xf32>
    %29 = vector.shape_cast %26 : vector<8x8xf32> to vector<1x8x8xf32>
    tpu.vector_store %arg5[%c0_15, %c0_16, %c0_17], %29 {strides = array<i32>} : memref<1x8x8xf32, #tpu.memory_space<vmem>>, vector<1x8x8xf32>,
    return
  }
  func.func @transform_0(%arg0: i32) -> (i32, i32, i32) {
    %c0_i32 = arith.constant 0 : i32
    %c0_i32_0 = arith.constant 0 : i32
    %c0_i32_1 = arith.constant 0 : i32
    return %arg0, %c0_i32, %c0_i32_0 : i32, i32, i32
  }
  func.func @transform_1(%arg0: i32) -> (i32, i32) {
    %c0_i32 = arith.constant 0 : i32
    %c0_i32_0 = arith.constant 0 : i32
    %c0_i32_1 = arith.constant 0 : i32
    return %c0_i32, %c0_i32_0 : i32, i32
  }
  func.func @transform_2(%arg0: i32) -> (i32, i32) {
    %c0_i32 = arith.constant 0 : i32
    %c0_i32_0 = arith.constant 0 : i32
    %c0_i32_1 = arith.constant 0 : i32
    return %c0_i32, %c0_i32_0 : i32, i32
  }
  func.func @transform_3(%arg0: i32) -> (i32, i32) {
    %c0_i32 = arith.constant 0 : i32
    %c0_i32_0 = arith.constant 0 : i32
    %c0_i32_1 = arith.constant 0 : i32
    return %c0_i32, %c0_i32_0 : i32, i32
  }
  func.func @transform_4(%arg0: i32) -> (i32, i32, i32) {
    %c0_i32 = arith.constant 0 : i32
    %c0_i32_0 = arith.constant 0 : i32
    %c0_i32_1 = arith.constant 0 : i32
    return %arg0, %c0_i32, %c0_i32_0 : i32, i32, i32
  }
  func.func @transform_5(%arg0: i32) -> (i32, i32) {
    %c0_i32 = arith.constant 0 : i32
    %c0_i32_0 = arith.constant 0 : i32
    %c0_i32_1 = arith.constant 0 : i32
    return %c0_i32, %c0_i32_0 : i32, i32
  }
}

</mosaic_0001>

<llo_original>
// kernel: tpu_custom_call.1
$region0: #{tpu_custom_call.1}
  #allocation0 [shape = 'u32[]', space=smem, size = 0x4, offset = 0x4, fixed_abs, tag = 'smem constant byte address 0x4 - core index']
  #allocation1 [shape = 'u32[144,128]{1,0:T(1,128)}', space=vmem, size = 0x12000, scoped, tag = 'internal scratch']
  %s0 = inlined_call_operand.vmem [shape: f32[1,8,16], index: 0, kind: input, shape index: {}]
  %s1 = inlined_call_operand.vmem [shape: f32[8,32], index: 1, kind: input, shape index: {}]
  %s2 = inlined_call_operand.vmem [shape: f32[48,40], index: 2, kind: input, shape index: {}]
  %s3 = inlined_call_operand.vmem [shape: f32[1,40], index: 3, kind: input, shape index: {}]
  %s4 = inlined_call_operand.hbm [shape: f32[1,8,8], index: 4, kind: output, shape index: {0}]
  %s5 = inlined_call_operand.hbm [shape: f32[8,32], index: 5, kind: output, shape index: {1}]
  %6 = xla_tuple %s4, %s5
  %s7 = sld [smem:[#allocation0]]
  $region38: #{tpu_custom_call.1} parent=0
    _
  %s9 = ssub.s32 1, %s7
  %s10 = scalar_select 0, %s9, %s7
  $region1: #{tpu_custom_call.1} parent=0
    #allocation2 [shape = 'u8[4096]{0}', space=vmem, size = 0x1000, scoped, tag = 'output window, operand 0, single buffered']
    #allocation3 [shape = 's32[1]{0}', space=sflag, size = 0x4, scoped, tag = 'scoped memory for tpu_custom_call.1']
    #allocation4 [shape = 'u8[4096]{0}', space=vmem, size = 0x1000, scoped, tag = 'output window, operand 1, single buffered']
    #allocation5 [shape = 's32[1]{0}', space=sflag, size = 0x4, scoped, tag = 'scoped memory for tpu_custom_call.1']
    %11 = vsyncpa [#allocation3], 0
    %12 = vsyncpa [#allocation5], 0
    // Predicated region
    $region2: #{tpu_custom_call.1} parent=1 // pred_check
      _
    $region3: #{tpu_custom_call.1} parent=1 // pred_check_branch
      %14 = sbr.rel (0) target = $region5
    $region4: #{tpu_custom_call.1} parent=1 // pred_region
      _
    $region5: #{tpu_custom_call.1} parent=1 // pred_fallthru
      _
    // Predicated region
    $region6: #{tpu_custom_call.1} parent=1 // pred_check
      _
    $region7: #{tpu_custom_call.1} parent=1 // pred_check_branch
      %16 = sbr.rel (0) target = $region9
    $region8: #{tpu_custom_call.1} parent=1 // pred_region
      _
    $region9: #{tpu_custom_call.1} parent=1 // pred_fallthru
      _
    // Predicated region
    $region10: #{tpu_custom_call.1} parent=1 // pred_check
      _
    $region11: #{tpu_custom_call.1} parent=1 // pred_check_branch
      %18 = sbr.rel (0) target = $region13
    $region12: #{tpu_custom_call.1} parent=1 // pred_region
      _
    $region13: #{tpu_custom_call.1} parent=1 // pred_fallthru
      _
    // Predicated region
    $region14: #{tpu_custom_call.1} parent=1 // pred_check
      _
    $region15: #{tpu_custom_call.1} parent=1 // pred_check_branch
      %20 = sbr.rel (0) target = $region17
    $region16: #{tpu_custom_call.1} parent=1 // pred_region
      _
    $region17: #{tpu_custom_call.1} parent=1 // pred_fallthru
      _
    %p21 = scmp.eq.s32.totalorder 0, 0
    // Predicated region
    $region18: #{tpu_custom_call.1} parent=1 // pred_check
      %p22 = pneg %p21
    $region19: #{tpu_custom_call.1} parent=1 // pred_check_branch
      %24 = sbr.rel (%p22) target = $region21
    $region20: #{tpu_custom_call.1} parent=1 // pred_region
      %v25 = vld [vmem:[%s1] sm:$0xff]
      %vm26 = vcmask 261120
      %27 = vst.msk [vmem:[#allocation4] sm:$0xff] %vm26, %v25
    $region21: #{tpu_custom_call.1} parent=1 // pred_fallthru
      _
    %v28 = vld [vmem:[%s0] sm:$0xff]
    %v29 = vld [vmem:[#allocation4] sm:$0xff]
    %v30 = vld [vmem:[%s2] sm:$0xff]
    %v31 = vld [vmem:[%s2 + $0x8] sm:$0xff]
    %v32 = vld [vmem:[%s2 + $0x10] sm:$0xff]
    %v33 = vld [vmem:[%s2 + $0x18] sm:$0xff]
    %v34 = vld [vmem:[%s2 + $0x20] sm:$0xff]
    %v35 = vld [vmem:[%s2 + $0x28] sm:$0xff]
    %vm36 = vcmask 261120
    %v38 = vsel %vm36, %v29, 0
    %40 = vmatprep.subr.mxu0 0.0
    %41 = vmatpush1.msra.mxu0 %v32
    %42 = vmatprep.subr.mxu0 0.0
    %43 = vmatpush1.msra.mxu0 %v33
    %44 = vmatprep.subr.mxu0 0.0
    %45 = vmatpush1.msra.mxu0 %v34
    %46 = vmatprep.subr.mxu0 0.0
    %47 = vmatpush1.msra.mxu0 %v35
    %48 = vmatprep.subr.mxu0 0.0
    %49 = vmatpush1.msra.mxu0 0.0
    %50 = vmatprep.subr.mxu0 0.0
    %51 = vmatpush1.msra.mxu0 0.0
    %52 = vmatprep.subr.mxu0 0.0
    %53 = vmatpush1.msra.mxu0 0.0
    %54 = vmatprep.subr.mxu0 0.0
    %55 = vmatpush1.msra.mxu0 0.0
    %56 = vmatprep.subr.mxu0 0.0
    %57 = vmatpush1.msra.mxu0 0.0
    %58 = vmatprep.subr.mxu0 0.0
    %59 = vmatpush1.msra.mxu0 0.0
    %60 = vmatprep.subr.mxu0 0.0
    %61 = vmatpush1.msra.mxu0 0.0
    %62 = vmatprep.subr.mxu0 0.0
    %63 = vmatpush1.msra.mxu0 0.0
    %64 = vmatprep.subr.mxu0 0.0
    %65 = vmatpush1.msra.mxu0 0.0
    %66 = vmatprep.subr.mxu0 0.0
    %67 = vmatpush1.msra.mxu0 0.0
    %68 = vmatprep.subr.mxu0 0.0
    %69 = vmatpush1.msra.mxu0 0.0
    %70 = vmatprep.subr.mxu0 0.0
    %71 = vmatpush1.msra.mxu0 0.0
    %72 = vmatprep.subr.mxu0 0.0
    %73 = vmatpush1.msra.mxu0 0.0
    %74 = vmatprep.subr.mxu0 0.0
    %75 = vmatpush1.msra.mxu0 0.0
    %76 = vmatprep.subr.mxu0 0.0
    %77 = vmatpush1.msra.mxu0 0.0
    %78 = vmatprep.subr.mxu0 0.0
    %79 = vmatpush1.msra.mxu0 0.0
    %80 = vmatprep.subr.mxu0 0.0
    %81 = vmatpush1.msra.mxu0 0.0
    %82 = vmatprep.subr.mxu0 0.0
    %83 = vmatpush1.msra.mxu0 0.0
    %84 = vmatprep.subr.mxu0 0.0
    %85 = vmatpush1.msra.mxu0 0.0
    %86 = vmatprep.subr.mxu0 0.0
    %87 = vmatpush1.msra.mxu0 0.0
    %88 = vmatprep.subr.mxu0 0.0
    %89 = vmatpush1.msra.mxu0 0.0
    %90 = vmatprep.subr.mxu0 0.0
    %91 = vmatpush1.msra.mxu0 0.0
    %92 = vmatprep.subr.mxu0 0.0
    %93 = vmatpush1.msra.mxu0 0.0
    %94 = vmatprep.subr.mxu0 0.0
    %95 = vmatpush1.msra.mxu0 0.0
    %96 = vmatprep.subr.mxu0 0.0
    %97 = vmatpush1.msra.mxu0 0.0
    %98 = vmatprep.subr.mxu0 0.0
    %99 = vmatpush1.msra.mxu0 0.0
    %100 = vmatprep.subr.mxu0 0.0
    %101 = vmatpush1.msra.mxu0 0.0
    %102 = vmatprep.subr.mxu0 0.0
    %103 = vmatpush1.msra.mxu0 0.0
    %104 = vmatprep.mubr.f32.mxu0 0.0
    %105 = vmatmul.mubr.f32.gmra.mrb[0].mxu0 %v38
    %v106 = vpop.f32.mrb[0].mxu0
    %v107 = vadd.f32 0.0, %v106
    %v108 = vpop.f32.mrb[0].mxu0
    %109 = vdwg.mxu0
    %vm110 = vcmask 130048
    %v112 = vsel %vm110, %v28, 0
    %114 = vmatprep.subr.mxu0 0.0
    %115 = vmatpush1.msra.mxu0 %v30
    %116 = vmatprep.subr.mxu0 0.0
    %117 = vmatpush1.msra.mxu0 %v31
    %118 = vmatprep.subr.mxu0 0.0
    %119 = vmatpush1.msra.mxu0 0.0
    %120 = vmatprep.subr.mxu0 0.0
    %121 = vmatpush1.msra.mxu0 0.0
    %122 = vmatprep.subr.mxu0 0.0
    %123 = vmatpush1.msra.mxu0 0.0
    %124 = vmatprep.subr.mxu0 0.0
    %125 = vmatpush1.msra.mxu0 0.0
    %126 = vmatprep.subr.mxu0 0.0
    %127 = vmatpush1.msra.mxu0 0.0
    %128 = vmatprep.subr.mxu0 0.0
    %129 = vmatpush1.msra.mxu0 0.0
    %130 = vmatprep.subr.mxu0 0.0
    %131 = vmatpush1.msra.mxu0 0.0
    %132 = vmatprep.subr.mxu0 0.0
    %133 = vmatpush1.msra.mxu0 0.0
    %134 = vmatprep.subr.mxu0 0.0
    %135 = vmatpush1.msra.mxu0 0.0
    %136 = vmatprep.subr.mxu0 0.0
    %137 = vmatpush1.msra.mxu0 0.0
    %138 = vmatprep.subr.mxu0 0.0
    %139 = vmatpush1.msra.mxu0 0.0
    %140 = vmatprep.subr.mxu0 0.0
    %141 = vmatpush1.msra.mxu0 0.0
    %142 = vmatprep.subr.mxu0 0.0
    %143 = vmatpush1.msra.mxu0 0.0
    %144 = vmatprep.subr.mxu0 0.0
    %145 = vmatpush1.msra.mxu0 0.0
    %146 = vmatprep.subr.mxu0 0.0
    %147 = vmatpush1.msra.mxu0 0.0
    %148 = vmatprep.subr.mxu0 0.0
    %149 = vmatpush1.msra.mxu0 0.0
    %150 = vmatprep.subr.mxu0 0.0
    %151 = vmatpush1.msra.mxu0 0.0
    %152 = vmatprep.subr.mxu0 0.0
    %153 = vmatpush1.msra.mxu0 0.0
    %154 = vmatprep.subr.mxu0 0.0
    %155 = vmatpush1.msra.mxu0 0.0
    %156 = vmatprep.subr.mxu0 0.0
    %157 = vmatpush1.msra.mxu0 0.0
    %158 = vmatprep.subr.mxu0 0.0
    %159 = vmatpush1.msra.mxu0 0.0
    %160 = vmatprep.subr.mxu0 0.0
    %161 = vmatpush1.msra.mxu0 0.0
    %162 = vmatprep.subr.mxu0 0.0
    %163 = vmatpush1.msra.mxu0 0.0
    %164 = vmatprep.subr.mxu0 0.0
    %165 = vmatpush1.msra.mxu0 0.0
    %166 = vmatprep.subr.mxu0 0.0
    %167 = vmatpush1.msra.mxu0 0.0
    %168 = vmatprep.subr.mxu0 0.0
    %169 = vmatpush1.msra.mxu0 0.0
    %170 = vmatprep.subr.mxu0 0.0
    %171 = vmatpush1.msra.mxu0 0.0
    %172 = vmatprep.subr.mxu0 0.0
    %173 = vmatpush1.msra.mxu0 0.0
    %174 = vmatprep.subr.mxu0 0.0
    %175 = vmatpush1.msra.mxu0 0.0
    %176 = vmatprep.subr.mxu0 0.0
    %177 = vmatpush1.msra.mxu0 0.0
    %178 = vmatprep.mubr.f32.mxu0 0.0
    %179 = vmatmul.mubr.f32.gmra.mrb[0].mxu0 %v112
    %v180 = vpop.f32.mrb[0].mxu0
    %v181 = vadd.f32 %v107, %v180
    %v182 = vpop.f32.mrb[0].mxu0
    %183 = vdwg.mxu0
    %v184 = vld [vmem:[%s3] sm:$0x1]
    %v186 = vlaneseq
    %v187 = vshrl.u32 %v186, 7
    %v188 = vsub.s32 0, %v187
    %v189 = vrot.slane %v184, %v188
    %v191 = vadd.f32 %v181, %v189
    %vm192 = vcmask 326912
    %v193 = vsel %vm192, %v191, -inf
    %194 = vmax.xlane.f32.xlu0 %v193
    %v195 = vpop.xlane.xlu0 %194
    %v196 = vsub.f32 %v191, %v195
    %v197 = vmul.f32 %v196, 1.442695
    %v198 = vpow.pop %v197
    %200 = vrot.lane.b32.xlu0 %v198, 96
    %v201 = vpop.permute.xlu0 %200
    %vm203 = vcmask 64512
    %v204 = vsel %vm203, %v201, 0.0
    %205 = vadd.xlane.f32.xlu0 %v204
    %v206 = vpop.xlane.xlu0 %205
    %v207 = vlog2.pop %v206
    %v208 = vmul.f32 %v207, 0.6931472
    %209 = vst.msk [vmem:[#allocation4] sm:$0xff] %vm36, %v191
    %v210 = vsub.f32 %v196, %v208
    %212 = vrot.lane.b32.xlu0 %v210, 96
    %v213 = vpop.permute.xlu0 %212
    %215 = vst.msk [vmem:[#allocation2] sm:$0xff] %vm203, %v213
    // Predicated region
    $region22: #{tpu_custom_call.1} parent=1 // pred_check
      _
    $region23: #{tpu_custom_call.1} parent=1 // pred_check_branch
      %217 = sbr.rel (0) target = $region25
    $region24: #{tpu_custom_call.1} parent=1 // pred_region
      %s219 = ssub.s32 128, 128
      %220 = vsyncadd [#allocation3], %s219
      %s222 = sshll.u32 [#allocation2], 4
      %s223 = int_to_ptr.vmem [resolvable:$true] %s222
      %225 = dma.vmem_to_hbm [thread:$0]  %s223, 128, %s4, [#allocation3]
    $region25: #{tpu_custom_call.1} parent=1 // pred_fallthru
      _
    // Predicated region
    $region26: #{tpu_custom_call.1} parent=1 // pred_check
      _
    $region27: #{tpu_custom_call.1} parent=1 // pred_check_branch
      %227 = sbr.rel (0) target = $region29
    $region28: #{tpu_custom_call.1} parent=1 // pred_region
      %s229 = ssub.s32 128, 128
      %230 = vsyncadd [#allocation5], %s229
      %s232 = sshll.u32 [#allocation4], 4
      %s233 = int_to_ptr.vmem [resolvable:$true] %s232
      %235 = dma.vmem_to_hbm [thread:$0]  %s233, 128, %s5, [#allocation5]
    $region29: #{tpu_custom_call.1} parent=1 // pred_fallthru
      _
    // Predicated region
    $region30: #{tpu_custom_call.1} parent=1 // pred_check
      _
    $region31: #{tpu_custom_call.1} parent=1 // pred_check_branch
      %237 = sbr.rel (0) target = $region33
    $region32: #{tpu_custom_call.1} parent=1 // pred_region
      %238 = dma.done [#allocation3], 128
    $region33: #{tpu_custom_call.1} parent=1 // pred_fallthru
      _
    // Predicated region
    $region34: #{tpu_custom_call.1} parent=1 // pred_check
      _
    $region35: #{tpu_custom_call.1} parent=1 // pred_check_branch
      %240 = sbr.rel (0) target = $region37
    $region36: #{tpu_custom_call.1} parent=1 // pred_region
      %241 = dma.done [#allocation5], 128
    $region37: #{tpu_custom_call.1} parent=1 // pred_fallthru
      _
    %242 = vsyncpa [#allocation3], 1
    %243 = vsyncpa [#allocation5], 1

</llo_original>
